<compile_context>
chip_gen: v7x
topology: tpu7x:2x2x1
jax: 0.10.0
libtpu: 0.0.40
codegen_flags: <defaults>
</compile_context>

<pallas_src>
import math

import jax
import jax.numpy as jnp
from jax.experimental import pallas as pl
from jax.experimental.pallas import tpu as pltpu


def _compressor_kernel(x_ref, w1_ref, b1_ref, w2_ref, b2_ref, o_ref):
    # x_ref : (bm, T)  x.dtype (f32 here)   -- activation tile
    # w1_ref: (T, H)   bf16                 -- resident (constant index_map)
    # b1_ref: (1, H)   f32                  -- resident
    # w2_ref: (H, H)   bf16                 -- resident
    # b2_ref: (1, H)   f32                  -- resident
    # o_ref : (bm, H)  x.dtype

    # Linear 1 on the MXU: bf16 inputs, f32 accumulation; bias add in f32.
    x_bf = x_ref[...].astype(w1_ref.dtype)
    h = jnp.dot(x_bf, w1_ref[...], preferred_element_type=jnp.float32)
    h = h + b1_ref[...]
    # SiLU in f32 (sigmoid -> EUP, multiply -> VPU); only real H lanes, no padding.
    h = h * jax.nn.sigmoid(h)
    # Linear 2 on the MXU: activation cast to bf16, f32 accumulation; bias in f32.
    y = jnp.dot(h.astype(w2_ref.dtype), w2_ref[...],
                preferred_element_type=jnp.float32)
    y = y + b2_ref[...]
    # Tanh in f32, store in the output dtype (unpadded -> no epilogue pass needed).
    o_ref[...] = jnp.tanh(y).astype(o_ref.dtype)


def _round_up(n: int, m: int) -> int:
    return ((n + m - 1) // m) * m


def prepare_weights(w1, b1, w2, b2, *, compute_dtype=jnp.bfloat16):
    """One-time weight preparation (PyTorch (out, in) layout -> kernel layout).

    Hoisted out of the per-call path so callers can cache the prepared bf16
    weights instead of re-running the transpose/cast on every invocation.
    """
    w1_t = jnp.transpose(w1).astype(compute_dtype)       # (T, H)
    w2_t = jnp.transpose(w2).astype(compute_dtype)       # (H, H)
    b1_r = b1.astype(jnp.float32).reshape(1, -1)          # (1, H)
    b2_r = b2.astype(jnp.float32).reshape(1, -1)          # (1, H)
    return w1_t, b1_r, w2_t, b2_r


def convex_compressor(x, w1_t, b1_r, w2_t, b2_r, *, bm_target=1024):
    """x: (B, T).  Prepared weights from prepare_weights().  Returns (B, T//2) in x.dtype."""
    B, T = x.shape
    H = w1_t.shape[1]
    assert H == T // 2
    assert w1_t.shape == (T, H) and w2_t.shape == (H, H)
    assert b1_r.shape == (1, H) and b2_r.shape == (1, H)

    # ---- Batch tiling ------------------------------------------------------
    # Balanced tiles: avoids up-to-(bm-1) rows of wasted work when B is just above
    # a tile multiple, and keeps >= 2 grid steps whenever possible so the
    # "parallel" grid axis can shard across v7x's two TensorCores.  bm is a
    # multiple of 8 (sublane); the grid uses cdiv, so a ragged last tile is
    # handled by Pallas' masked boundary blocks rather than HBM padding.
    if B > 8:
        n_tiles = max(pl.cdiv(B, bm_target), 2)
    else:
        n_tiles = 1
    bm = _round_up(pl.cdiv(B, n_tiles), 8)
    grid = (pl.cdiv(B, bm),)

    # ---- Cost estimate (real, unpadded work) --------------------------------
    def _nbytes(a):
        return a.size * a.dtype.itemsize

    flops = 2 * B * (T * H + H * H)
    transcendentals = 2 * B * H                      # sigmoid + tanh
    bytes_accessed = (_nbytes(x) + _nbytes(w1_t) + _nbytes(b1_r)
                      + _nbytes(w2_t) + _nbytes(b2_r)
                      + B * H * x.dtype.itemsize)

    return pl.pallas_call(
        _compressor_kernel,
        out_shape=jax.ShapeDtypeStruct((B, H), x.dtype),
        grid=grid,
        in_specs=[
            pl.BlockSpec((bm, T), lambda i: (i, 0)),   # x tile (last dim = full T)
            pl.BlockSpec((T, H), lambda i: (0, 0)),    # W1^T (resident)
            pl.BlockSpec((1, H), lambda i: (0, 0)),    # b1   (resident)
            pl.BlockSpec((H, H), lambda i: (0, 0)),    # W2^T (resident)
            pl.BlockSpec((1, H), lambda i: (0, 0)),    # b2   (resident)
        ],
        out_specs=pl.BlockSpec((bm, H), lambda i: (i, 0)),   # unpadded (B, H) output
        compiler_params=pltpu.CompilerParams(
            dimension_semantics=("parallel",),
            # No vmem_limit_bytes override: working set is ~1 MiB; 64 MiB would
            # over-reserve the whole of v7x's physical VMEM.
        ),
        cost_estimate=pl.CostEstimate(
            flops=flops,
            transcendentals=transcendentals,
            bytes_accessed=bytes_accessed,
        ),
    )(x, w1_t, b1_r, w2_t, b2_r)


def _torch_linear_init(key, out_features, in_features):
    """Deterministic init matching nn.Linear defaults: U(-1/sqrt(fan_in), 1/sqrt(fan_in))."""
    k_w, k_b = jax.random.split(key)
    bound = 1.0 / math.sqrt(in_features)
    w = jax.random.uniform(k_w, (out_features, in_features), jnp.float32, -bound, bound)
    b = jax.random.uniform(k_b, (out_features,), jnp.float32, -bound, bound)
    return w, b


def _reference(x, w1, b1, w2, b2, *, compute_dtype=jnp.float32):
    """Pure-JAX reference.  With compute_dtype=bf16 it mirrors the kernel's rounding
    of the matmul inputs (f32 accumulation, f32 activations)."""
    cast = lambda a: a.astype(compute_dtype).astype(jnp.float32)
    h = cast(x) @ cast(w1).T + b1
    h = h * jax.nn.sigmoid(h)          # SiLU
    y = cast(h) @ cast(w2).T + b2
    return jnp.tanh(y)


if __name__ == "__main__":
    input_len = 32    # T (sequence length)
    output_len = input_len // 2

    key = jax.random.PRNGKey(0)
    k_x, k_l1, k_l2 = jax.random.split(key, 3)

    w1, b1 = _torch_linear_init(k_l1, output_len, input_len)
    w2, b2 = _torch_linear_init(k_l2, output_len, output_len)
    prepped = prepare_weights(w1, b1, w2, b2)   # one-time, cacheable weight prep

    # B=16: even 2-step grid (exercises v7x megacore split); B=13: ragged masked tail.
    for B in (16, 13):
        x = jax.random.normal(jax.random.fold_in(k_x, B), (B, input_len), jnp.float32)

        out = convex_compressor(x, *prepped)
        out = jax.block_until_ready(out)
        assert out.shape == (B, output_len)
        assert out.dtype == x.dtype

        # Tight check vs. a reference that applies the same bf16 rounding to the
        # matmul inputs (f32 accumulation everywhere).
        ref_bf16 = _reference(x, w1, b1, w2, b2, compute_dtype=jnp.bfloat16)
        assert jnp.allclose(out, ref_bf16, atol=2e-3, rtol=2e-3), \
            f"B={B}: mismatch vs bf16-rounded reference"

        # Coarse sanity check vs. the pure-f32 reference (bf16 matmul inputs ~1e-3 abs).
        ref_f32 = _reference(x, w1, b1, w2, b2, compute_dtype=jnp.float32)
        assert jnp.allclose(out, ref_f32, atol=5e-2), f"B={B}: mismatch vs f32 reference"

    print("KERNEL_OK")
</pallas_src>

<mosaic_0001>
module attributes {stable_mosaic.version = 11 : i64} {
  func.func @_compressor_kernel(%arg0: i32, %arg1: memref<8x32xf32, #tpu.memory_space<vmem>>, %arg2: memref<32x16xbf16, #tpu.memory_space<vmem>>, %arg3: memref<1x16xf32, #tpu.memory_space<vmem>>, %arg4: memref<16x16xbf16, #tpu.memory_space<vmem>>, %arg5: memref<1x16xf32, #tpu.memory_space<vmem>>, %arg6: memref<8x16xf32, #tpu.memory_space<vmem>>) attributes {dimension_semantics = [#tpu.dimension_semantics<parallel>], iteration_bounds = array<i64: 2>, scalar_prefetch = 0 : i64, scratch_operands = 0 : i64, tpu.core_type = #tpu.core_type<tc>, window_params = [{transform_indices = @transform_0, window_bounds = array<i64: 8, 32>}, {pipeline_mode = #tpu.pipeline_mode<synchronous>, transform_indices = @transform_1, window_bounds = array<i64: 32, 16>}, {pipeline_mode = #tpu.pipeline_mode<synchronous>, transform_indices = @transform_2, window_bounds = array<i64: 1, 16>}, {pipeline_mode = #tpu.pipeline_mode<synchronous>, transform_indices = @transform_3, window_bounds = array<i64: 16, 16>}, {pipeline_mode = #tpu.pipeline_mode<synchronous>, transform_indices = @transform_4, window_bounds = array<i64: 1, 16>}, {transform_indices = @transform_5, window_bounds = array<i64: 8, 16>}]} {
    %c0 = arith.constant 0 : index
    %c0_0 = arith.constant 0 : index
    %0 = vector.load %arg1[%c0, %c0_0] : memref<8x32xf32, #tpu.memory_space<vmem>>, vector<8x32xf32>
    %1 = arith.truncf %0 : vector<8x32xf32> to vector<8x32xbf16>
    %c0_1 = arith.constant 0 : index
    %c0_2 = arith.constant 0 : index
    %2 = vector.load %arg2[%c0_1, %c0_2] : memref<32x16xbf16, #tpu.memory_space<vmem>>, vector<32x16xbf16>
    %cst = arith.constant dense<0.000000e+00> : vector<8x16xf32>
    %3 = tpu.matmul %1, %2, %cst {dimension_numbers = #tpu.dot_dimension_numbers<[1], [0], [0], [1], [0, 0, 1, 1], [], []>} : vector<8x32xbf16>, vector<32x16xbf16>, vector<8x16xf32> -> vector<8x16xf32>
    %c0_3 = arith.constant 0 : index
    %c0_4 = arith.constant 0 : index
    %4 = vector.load %arg3[%c0_3, %c0_4] : memref<1x16xf32, #tpu.memory_space<vmem>>, vector<1x16xf32>
    %5 = vector.broadcast %4 : vector<1x16xf32> to vector<8x16xf32>
    %6 = arith.addf %3, %5 : vector<8x16xf32>
    %7 = arith.negf %6 : vector<8x16xf32>
    %8 = math.exp %7 : vector<8x16xf32>
    %cst_5 = arith.constant 1.000000e+00 : f32
    %9 = vector.broadcast %cst_5 : f32 to vector<8x16xf32>
    %10 = arith.addf %9, %8 : vector<8x16xf32>
    %11 = arith.divf %9, %10 : vector<8x16xf32>
    %12 = arith.mulf %6, %11 : vector<8x16xf32>
    %13 = arith.truncf %12 : vector<8x16xf32> to vector<8x16xbf16>
    %c0_6 = arith.constant 0 : index
    %c0_7 = arith.constant 0 : index
    %14 = vector.load %arg4[%c0_6, %c0_7] : memref<16x16xbf16, #tpu.memory_space<vmem>>, vector<16x16xbf16>
    %cst_8 = arith.constant dense<0.000000e+00> : vector<8x16xf32>
    %15 = tpu.matmul %13, %14, %cst_8 {dimension_numbers = #tpu.dot_dimension_numbers<[1], [0], [0], [1], [0, 0, 1, 1], [], []>} : vector<8x16xbf16>, vector<16x16xbf16>, vector<8x16xf32> -> vector<8x16xf32>
    %c0_9 = arith.constant 0 : index
    %c0_10 = arith.constant 0 : index
    %16 = vector.load %arg5[%c0_9, %c0_10] : memref<1x16xf32, #tpu.memory_space<vmem>>, vector<1x16xf32>
    %17 = vector.broadcast %16 : vector<1x16xf32> to vector<8x16xf32>
    %18 = arith.addf %15, %17 : vector<8x16xf32>
    %19 = math.tanh %18 : vector<8x16xf32>
    %c0_11 = arith.constant 0 : index
    %c0_12 = arith.constant 0 : index
    %20 = vector.load %arg6[%c0_11, %c0_12] : memref<8x16xf32, #tpu.memory_space<vmem>>, vector<8x16xf32>
    tpu.vector_store %arg6[%c0_11, %c0_12], %19 {strides = array<i32>} : memref<8x16xf32, #tpu.memory_space<vmem>>, vector<8x16xf32>,
    return
  }
  func.func @transform_0(%arg0: i32) -> (i32, i32) {
    %c0_i32 = arith.constant 0 : i32
    %c0_i32_0 = arith.constant 0 : i32
    return %arg0, %c0_i32 : i32, i32
  }
  func.func @transform_1(%arg0: i32) -> (i32, i32) {
    %c0_i32 = arith.constant 0 : i32
    %c0_i32_0 = arith.constant 0 : i32
    %c0_i32_1 = arith.constant 0 : i32
    return %c0_i32, %c0_i32_0 : i32, i32
  }
  func.func @transform_2(%arg0: i32) -> (i32, i32) {
    %c0_i32 = arith.constant 0 : i32
    %c0_i32_0 = arith.constant 0 : i32
    %c0_i32_1 = arith.constant 0 : i32
    return %c0_i32, %c0_i32_0 : i32, i32
  }
  func.func @transform_3(%arg0: i32) -> (i32, i32) {
    %c0_i32 = arith.constant 0 : i32
    %c0_i32_0 = arith.constant 0 : i32
    %c0_i32_1 = arith.constant 0 : i32
    return %c0_i32, %c0_i32_0 : i32, i32
  }
  func.func @transform_4(%arg0: i32) -> (i32, i32) {
    %c0_i32 = arith.constant 0 : i32
    %c0_i32_0 = arith.constant 0 : i32
    %c0_i32_1 = arith.constant 0 : i32
    return %c0_i32, %c0_i32_0 : i32, i32
  }
  func.func @transform_5(%arg0: i32) -> (i32, i32) {
    %c0_i32 = arith.constant 0 : i32
    %c0_i32_0 = arith.constant 0 : i32
    return %arg0, %c0_i32 : i32, i32
  }
}

</mosaic_0001>

<llo_original>
// kernel: tpu_custom_call.1
$region0: #{tpu_custom_call.1}
  #allocation0 [shape = 'u32[]', space=smem, size = 0x4, offset = 0x4, fixed_abs, tag = 'smem constant byte address 0x4 - core index']
  #allocation1 [shape = 'u32[144,128]{1,0:T(1,128)}', space=vmem, size = 0x12000, scoped, tag = 'internal scratch']
  %s0 = inlined_call_operand.vmem [shape: f32[16,32], index: 0, kind: input, shape index: {}]
  %s1 = inlined_call_operand.vmem [shape: bf16[32,16], index: 1, kind: input, shape index: {}]
  %s2 = inlined_call_operand.vmem [shape: f32[1,16], index: 2, kind: input, shape index: {}]
  %s3 = inlined_call_operand.vmem [shape: bf16[16,16], index: 3, kind: input, shape index: {}]
  %s4 = inlined_call_operand.vmem [shape: f32[1,16], index: 4, kind: input, shape index: {}]
  %s5 = inlined_call_operand.hbm [shape: f32[16,16], index: 5, kind: output, shape index: {}]
  %s6 = sld [smem:[#allocation0]]
  $region53: #{tpu_custom_call.1} parent=0
    _
  %s8 = ssub.s32 1, %s6
  %s9 = scalar_select 0, %s8, %s6
  $region1: #{tpu_custom_call.1} parent=0
    #allocation2 [shape = 'u8[8192]{0}', space=vmem, size = 0x2000, scoped, tag = 'output window, operand 0']
    #allocation3 [shape = 's32[2]{0}', space=sflag, size = 0x8, scoped, tag = 'scoped memory for tpu_custom_call.1']
    %10 = vsyncpa [#allocation3], 0
    %s11 = scalar_lea.sflag [#allocation3], 1
    %12 = vsyncpa %s11, 0
    loop: start=0, step=1, limit=4
    $region2: #{tpu_custom_call.1} parent=1 // loop_pre_header
      _
    $region3: #{tpu_custom_call.1} parent=1 // loop_header
      %s14 = sphi 0, %s18
      %p15 = scmp.ge.s32.totalorder %s14, 4
      %s24 = sphi 0, %s26
      %s27 = sphi 0, %s24
      %s28 = sphi 0, %s27
      %s44 = sphi 0, %s28
      %s48 = sphi 0, %s48
      %s50 = sphi 0, %s48
      %s51 = sphi 0, %s50
      %s65 = sphi 0, %s51
      %s69 = sphi 0, %s69
      %s71 = sphi 0, %s69
      %s72 = sphi 0, %s71
      %s86 = sphi 0, %s72
      %s90 = sphi 0, %s90
      %s92 = sphi 0, %s90
      %s93 = sphi 0, %s92
      %s107 = sphi 0, %s93
      %s111 = sphi 0, %s111
      %s113 = sphi 0, %s111
      %s114 = sphi 0, %s113
      %s128 = sphi 0, %s114
      %s134 = sphi 0, %s136
      %s137 = sphi 0, %s134
      %s138 = sphi 0, %s137
      %s154 = sphi 0, %s138
    $region4: #{tpu_custom_call.1} parent=1 // loop_header_branch
      %17 = sbr.rel (%p15) target = $region8
    $region5: #{tpu_custom_call.1} parent=1 // loop_body
      %s19 = ssub.s32 %s14, 1
      %s20 = ssub.s32 %s14, 2
      %s21 = sadd.s32 %s14, 1
      %s22 = ssub.s32 %s14, %s21
      %p23 = scmp.eq.s32.totalorder %s22, 0
      %s25 = sadd.s32 %s24, 1
      %s26 = scalar_select %p23, %s24, %s25
      %p29 = pneg %p23
      %p30 = scmp.eq.s32.totalorder %s14, 1
      %p31 = por %p29, %p30
      %p32 = scmp.ne.s32.totalorder %s24, %s27
      %p33 = scmp.eq.s32.totalorder %s14, 0
      %p34 = por %p32, %p33
      %p35 = scmp.ne.s32.totalorder %s24, %s27
      %p36 = scmp.eq.s32.totalorder %s19, 1
      %p37 = por %p35, %p36
      %p38 = scmp.ne.s32.totalorder %s27, %s28
      %p39 = scmp.eq.s32.totalorder %s19, 0
      %p40 = por %p38, %p39
      %p41 = scmp.ne.s32.totalorder %s27, %s28
      %p42 = scmp.eq.s32.totalorder %s20, 1
      %p43 = por %p41, %p42
      %p45 = scmp.ne.s32.totalorder %s28, %s44
      %p46 = scmp.eq.s32.totalorder %s20, 0
      %p47 = por %p45, %p46
      %s49 = sadd.s32 %s48, 1
      %p52 = scmp.eq.s32.totalorder %s14, 1
      %p53 = scmp.ne.s32.totalorder %s48, %s50
      %p54 = scmp.eq.s32.totalorder %s14, 0
      %p55 = por %p53, %p54
      %p56 = scmp.ne.s32.totalorder %s48, %s50
      %p57 = scmp.eq.s32.totalorder %s19, 1
      %p58 = por %p56, %p57
      %p59 = scmp.ne.s32.totalorder %s50, %s51
      %p60 = scmp.eq.s32.totalorder %s19, 0
      %p61 = por %p59, %p60
      %p62 = scmp.ne.s32.totalorder %s50, %s51
      %p63 = scmp.eq.s32.totalorder %s20, 1
      %p64 = por %p62, %p63
      %p66 = scmp.ne.s32.totalorder %s51, %s65
      %p67 = scmp.eq.s32.totalorder %s20, 0
      %p68 = por %p66, %p67
      %s70 = sadd.s32 %s69, 1
      %p73 = scmp.eq.s32.totalorder %s14, 1
      %p74 = scmp.ne.s32.totalorder %s69, %s71
      %p75 = scmp.eq.s32.totalorder %s14, 0
      %p76 = por %p74, %p75
      %p77 = scmp.ne.s32.totalorder %s69, %s71
      %p78 = scmp.eq.s32.totalorder %s19, 1
      %p79 = por %p77, %p78
      %p80 = scmp.ne.s32.totalorder %s71, %s72
      %p81 = scmp.eq.s32.totalorder %s19, 0
      %p82 = por %p80, %p81
      %p83 = scmp.ne.s32.totalorder %s71, %s72
      %p84 = scmp.eq.s32.totalorder %s20, 1
      %p85 = por %p83, %p84
      %p87 = scmp.ne.s32.totalorder %s72, %s86
      %p88 = scmp.eq.s32.totalorder %s20, 0
      %p89 = por %p87, %p88
      %s91 = sadd.s32 %s90, 1
      %p94 = scmp.eq.s32.totalorder %s14, 1
      %p95 = scmp.ne.s32.totalorder %s90, %s92
      %p96 = scmp.eq.s32.totalorder %s14, 0
      %p97 = por %p95, %p96
      %p98 = scmp.ne.s32.totalorder %s90, %s92
      %p99 = scmp.eq.s32.totalorder %s19, 1
      %p100 = por %p98, %p99
      %p101 = scmp.ne.s32.totalorder %s92, %s93
      %p102 = scmp.eq.s32.totalorder %s19, 0
      %p103 = por %p101, %p102
      %p104 = scmp.ne.s32.totalorder %s92, %s93
      %p105 = scmp.eq.s32.totalorder %s20, 1
      %p106 = por %p104, %p105
      %p108 = scmp.ne.s32.totalorder %s93, %s107
      %p109 = scmp.eq.s32.totalorder %s20, 0
      %p110 = por %p108, %p109
      %s112 = sadd.s32 %s111, 1
      %p115 = scmp.eq.s32.totalorder %s14, 1
      %p116 = scmp.ne.s32.totalorder %s111, %s113
      %p117 = scmp.eq.s32.totalorder %s14, 0
      %p118 = por %p116, %p117
      %p119 = scmp.ne.s32.totalorder %s111, %s113
      %p120 = scmp.eq.s32.totalorder %s19, 1
      %p121 = por %p119, %p120
      %p122 = scmp.ne.s32.totalorder %s113, %s114
      %p123 = scmp.eq.s32.totalorder %s19, 0
      %p124 = por %p122, %p123
      %p125 = scmp.ne.s32.totalorder %s113, %s114
      %p126 = scmp.eq.s32.totalorder %s20, 1
      %p127 = por %p125, %p126
      %p129 = scmp.ne.s32.totalorder %s114, %s128
      %p130 = scmp.eq.s32.totalorder %s20, 0
      %p131 = por %p129, %p130
      %s132 = ssub.s32 %s14, %s21
      %p133 = scmp.eq.s32.totalorder %s132, 0
      %s135 = sadd.s32 %s134, 1
      %s136 = scalar_select %p133, %s134, %s135
      %p139 = pneg %p133
      %p140 = scmp.eq.s32.totalorder %s14, 1
      %p141 = por %p139, %p140
      %p142 = scmp.ne.s32.totalorder %s134, %s137
      %p143 = scmp.eq.s32.totalorder %s14, 0
      %p144 = por %p142, %p143
      %p145 = scmp.ne.s32.totalorder %s134, %s137
      %p146 = scmp.eq.s32.totalorder %s19, 1
      %p147 = por %p145, %p146
      %p148 = scmp.ne.s32.totalorder %s137, %s138
      %p149 = scmp.eq.s32.totalorder %s19, 0
      %p150 = por %p148, %p149
      %p151 = scmp.ne.s32.totalorder %s137, %s138
      %p152 = scmp.eq.s32.totalorder %s20, 1
      %p153 = por %p151, %p152
      %p155 = scmp.ne.s32.totalorder %s138, %s154
      %p156 = scmp.eq.s32.totalorder %s20, 0
      %p157 = por %p155, %p156
      %p158 = scmp.le.s32.totalorder 1, %s14
      %p159 = scmp.lt.s32.totalorder %s14, 3
      %p160 = pnand %p158, %p159
      %p161 = pneg %p160
      // Predicated region
      $region9: #{tpu_custom_call.1} parent=5 // pred_check
        _
      $region10: #{tpu_custom_call.1} parent=5 // pred_check_branch
        %163 = sbr.rel (%p160) target = $region12
      $region11: #{tpu_custom_call.1} parent=5 // pred_region
        %s164 = ssub.s32 %s14, 1
        // Predicated region
        $region13: #{tpu_custom_call.1} parent=11 // pred_check
          %p165 = pneg %p61
        $region14: #{tpu_custom_call.1} parent=11 // pred_check_branch
          %167 = sbr.rel (%p165) target = $region16
        $region15: #{tpu_custom_call.1} parent=11 // pred_region
          _
        $region16: #{tpu_custom_call.1} parent=11 // pred_fallthru
          _
        // Predicated region
        $region17: #{tpu_custom_call.1} parent=11 // pred_check
          %p168 = pneg %p82
        $region18: #{tpu_custom_call.1} parent=11 // pred_check_branch
          %170 = sbr.rel (%p168) target = $region20
        $region19: #{tpu_custom_call.1} parent=11 // pred_region
          _
        $region20: #{tpu_custom_call.1} parent=11 // pred_fallthru
          _
        // Predicated region
        $region21: #{tpu_custom_call.1} parent=11 // pred_check
          %p171 = pneg %p103
        $region22: #{tpu_custom_call.1} parent=11 // pred_check_branch
          %173 = sbr.rel (%p171) target = $region24
        $region23: #{tpu_custom_call.1} parent=11 // pred_region
          _
        $region24: #{tpu_custom_call.1} parent=11 // pred_fallthru
          _
        // Predicated region
        $region25: #{tpu_custom_call.1} parent=11 // pred_check
          %p174 = pneg %p124
        $region26: #{tpu_custom_call.1} parent=11 // pred_check_branch
          %176 = sbr.rel (%p174) target = $region28
        $region27: #{tpu_custom_call.1} parent=11 // pred_region
          _
        $region28: #{tpu_custom_call.1} parent=11 // pred_fallthru
          _
      $region12: #{tpu_custom_call.1} parent=5 // pred_fallthru
        _
      %p177 = scmp.lt.s32.totalorder %s14, 2
      // Predicated region
      $region29: #{tpu_custom_call.1} parent=5 // pred_check
        %p178 = pneg %p177
      $region30: #{tpu_custom_call.1} parent=5 // pred_check_branch
        %180 = sbr.rel (%p178) target = $region32
      $region31: #{tpu_custom_call.1} parent=5 // pred_region
        // Predicated region
        $region33: #{tpu_custom_call.1} parent=31 // pred_check
          %p181 = pneg %p34
        $region34: #{tpu_custom_call.1} parent=31 // pred_check_branch
          %183 = sbr.rel (%p181) target = $region36
        $region35: #{tpu_custom_call.1} parent=31 // pred_region
          %p184 = scmp.lt.s32.totalorder %s14, 1
          %s185 = scalar_select %p184, %s14, 1
          %s186 = smul.addr %s185, 8
          %s187 = scalar_lea.vmem %s0, %s186
        $region36: #{tpu_custom_call.1} parent=31 // pred_fallthru
          _
      $region32: #{tpu_custom_call.1} parent=5 // pred_fallthru
        _
      %p188 = scmp.le.s32.totalorder 1, %s14
      %p189 = scmp.lt.s32.totalorder %s14, 3
      %p190 = pnand %p188, %p189
      %p191 = pneg %p190
      // Predicated region
      $region37: #{tpu_custom_call.1} parent=5 // pred_check
        _
      $region38: #{tpu_custom_call.1} parent=5 // pred_check_branch
        %193 = sbr.rel (%p190) target = $region40
      $region39: #{tpu_custom_call.1} parent=5 // pred_region
        %s194 = ssub.s32 %s14, 1
        %p195 = scmp.lt.s32.totalorder %s19, 1
        %s196 = scalar_select %p195, %s19, 1
        %s197 = smul.addr %s196, 8
        %s198 = scalar_lea.vmem %s0, %s197
        %p199 = pneg %p40
        %p200 = pneg %p37
        %p201 = pneg %p61
        %p202 = pneg %p58
        %p203 = pneg %p82
        %p204 = pneg %p79
        %p205 = pneg %p103
        %p206 = pneg %p100
        %p207 = pneg %p124
        %p208 = pneg %p121
        %p209 = pneg %p150
        %p210 = pneg %p147
        %s211 = sand.u32 %s137, 1
        %s212 = scalar_lea.sflag [#allocation3], %s211
        %s213 = sand.u32 %s137, 1
        %s214 = smul.addr %s213, 8
        %s215 = scalar_lea.vmem [#allocation2], %s214
        %p216 = scmp.lt.s32.totalorder %s19, 1
        %s217 = scalar_select %p216, %s19, 1
        %s218 = smul.addr %s217, 8
        %s219 = scalar_lea.vmem %s0, %s218
        %v221 = vld [vmem:[%s219] sm:$0xff]
        %v222 = vpack.c.bf16 %v221, %v221
        %v223 = vld [vmem:[%s1] sm:$0xf]
        %v224 = vld [vmem:[%s1 + $0x4] sm:$0xf]
        %v225 = vld [vmem:[%s1 + $0x8] sm:$0xf]
        %v226 = vld [vmem:[%s1 + $0xc] sm:$0xf]
        %v227 = vld [vmem:[%s2] sm:$0x1]
        %v229 = vlaneseq
        %v230 = vshrl.u32 %v229, 7
        %v231 = vsub.s32 0, %v230
        %v232 = vrot.slane %v227, %v231
        %v238 = vunpack.c.l.b16 %v223
        %v239 = vunpack.c.l.b16 %v224
        %v240 = vunpack.c.l.b16 %v225
        %v241 = vunpack.c.l.b16 %v226
        %v242 = vpack.c.b16 %v239, %v238
        %v243 = vpack.c.b16 %v241, %v240
        %vm246 = vcmask 261120
        %v248 = vsel %vm246, %v222, 0
        %250 = vmatprep.subr.bf16.mxu0 0
        %251 = vmatpush1.bf16.msra.mxu0 %v242
        %252 = vmatprep.subr.bf16.mxu0 0
        %253 = vmatpush1.bf16.msra.mxu0 %v243
        %254 = vmatprep.subr.bf16.mxu0 0
        %255 = vmatpush1.bf16.msra.mxu0 0
        %256 = vmatprep.subr.bf16.mxu0 0
        %257 = vmatpush1.bf16.msra.mxu0 0
        %258 = vmatprep.subr.bf16.mxu0 0
        %259 = vmatpush1.bf16.msra.mxu0 0
        %260 = vmatprep.subr.bf16.mxu0 0
        %261 = vmatpush1.bf16.msra.mxu0 0
        %262 = vmatprep.subr.bf16.mxu0 0
        %263 = vmatpush1.bf16.msra.mxu0 0
        %264 = vmatprep.subr.bf16.mxu0 0
        %265 = vmatpush1.bf16.msra.mxu0 0
        %266 = vmatprep.subr.bf16.mxu0 0
        %267 = vmatpush1.bf16.msra.mxu0 0
        %268 = vmatprep.subr.bf16.mxu0 0
        %269 = vmatpush1.bf16.msra.mxu0 0
        %270 = vmatprep.subr.bf16.mxu0 0
        %271 = vmatpush1.bf16.msra.mxu0 0
        %272 = vmatprep.subr.bf16.mxu0 0
        %273 = vmatpush1.bf16.msra.mxu0 0
        %274 = vmatprep.subr.bf16.mxu0 0
        %275 = vmatpush1.bf16.msra.mxu0 0
        %276 = vmatprep.subr.bf16.mxu0 0
        %277 = vmatpush1.bf16.msra.mxu0 0
        %278 = vmatprep.subr.bf16.mxu0 0
        %279 = vmatpush1.bf16.msra.mxu0 0
        %280 = vmatprep.subr.bf16.mxu0 0
        %281 = vmatpush1.bf16.msra.mxu0 0
        %282 = vmatprep.mubr.bf16.mxu0 0
        %283 = vmatmul.mubr.bf16.gmra.mrb[0].mxu0 %v248
        %v284 = vpop.f32.mrb[0].mxu0
        %v285 = vadd.f32 %v232, %v284
        %v286 = vpop.f32.mrb[0].mxu0
        %v287 = vpop.f32.mrb[0].mxu0
        %v288 = vpop.f32.mrb[0].mxu0
        %289 = vdwg.mxu0
        %v290 = vxor.u32 %v285, 2147483648
        %v291 = vmul.f32 %v290, 1.442695
        %v292 = vpow.pop %v291
        %v293 = vadd.f32 %v292, 1.0
        %v294 = vrcp.pop %v293
        %v295 = vmul.f32 1.0, %v294
        %v296 = vmul.f32 %v285, %v295
        %v297 = vpack.c.bf16 %v296, %v296
        %v298 = vld [vmem:[%s3] sm:$0xf]
        %v299 = vld [vmem:[%s3 + $0x4] sm:$0xf]
        %v300 = vld [vmem:[%s4] sm:$0x1]
        %v302 = vlaneseq
        %v303 = vshrl.u32 %v302, 7
        %v304 = vsub.s32 0, %v303
        %v305 = vrot.slane %v300, %v304
        %v309 = vunpack.c.l.b16 %v298
        %v310 = vunpack.c.l.b16 %v299
        %v311 = vpack.c.b16 %v310, %v309
        %vm313 = vcmask 130048
        %v315 = vsel %vm313, %v297, 0
        %317 = vmatprep.subr.bf16.mxu0 0
        %318 = vmatpush1.bf16.msra.mxu0 %v311
        %319 = vmatprep.subr.bf16.mxu0 0
        %320 = vmatpush1.bf16.msra.mxu0 0
        %321 = vmatprep.subr.bf16.mxu0 0
        %322 = vmatpush1.bf16.msra.mxu0 0
        %323 = vmatprep.subr.bf16.mxu0 0
        %324 = vmatpush1.bf16.msra.mxu0 0
        %325 = vmatprep.subr.bf16.mxu0 0
        %326 = vmatpush1.bf16.msra.mxu0 0
        %327 = vmatprep.subr.bf16.mxu0 0
        %328 = vmatpush1.bf16.msra.mxu0 0
        %329 = vmatprep.subr.bf16.mxu0 0
        %330 = vmatpush1.bf16.msra.mxu0 0
        %331 = vmatprep.subr.bf16.mxu0 0
        %332 = vmatpush1.bf16.msra.mxu0 0
        %333 = vmatprep.subr.bf16.mxu0 0
        %334 = vmatpush1.bf16.msra.mxu0 0
        %335 = vmatprep.subr.bf16.mxu0 0
        %336 = vmatpush1.bf16.msra.mxu0 0
        %337 = vmatprep.subr.bf16.mxu0 0
        %338 = vmatpush1.bf16.msra.mxu0 0
        %339 = vmatprep.subr.bf16.mxu0 0
        %340 = vmatpush1.bf16.msra.mxu0 0
        %341 = vmatprep.subr.bf16.mxu0 0
        %342 = vmatpush1.bf16.msra.mxu0 0
        %343 = vmatprep.subr.bf16.mxu0 0
        %344 = vmatpush1.bf16.msra.mxu0 0
        %345 = vmatprep.subr.bf16.mxu0 0
        %346 = vmatpush1.bf16.msra.mxu0 0
        %347 = vmatprep.subr.bf16.mxu0 0
        %348 = vmatpush1.bf16.msra.mxu0 0
        %349 = vmatprep.mubr.bf16.mxu0 0
        %350 = vmatmul.mubr.bf16.gmra.mrb[0].mxu0 %v315
        %v351 = vpop.f32.mrb[0].mxu0
        %v352 = vadd.f32 %v305, %v351
        %v353 = vpop.f32.mrb[0].mxu0
        %v354 = vpop.f32.mrb[0].mxu0
        %v355 = vpop.f32.mrb[0].mxu0
        %356 = vdwg.mxu0
        %v357 = vtanh.pop %v352
        %358 = vst.msk [vmem:[%s215] sm:$0xff] %vm313, %v357
        %s359 = sand.u32 %s137, 1
        %s360 = scalar_lea.sflag [#allocation3], %s359
        %s361 = sand.u32 %s137, 1
        %s362 = smul.addr %s361, 8
        %s363 = scalar_lea.vmem [#allocation2], %s362
        // Predicated region
        $region41: #{tpu_custom_call.1} parent=39 // pred_check
          %p364 = pneg %p147
        $region42: #{tpu_custom_call.1} parent=39 // pred_check_branch
          %366 = sbr.rel (%p364) target = $region44
        $region43: #{tpu_custom_call.1} parent=39 // pred_region
          %s368 = ssub.s32 128, 128
          %369 = vsyncadd %s360, %s368
          %s370 = smul.addr %s19, 128
          %s371 = scalar_lea.hbm %s5, %s370
          %s373 = sshll.u32 %s363, 4
          %s374 = int_to_ptr.vmem [resolvable:$true] %s373
          %376 = dma.vmem_to_hbm [thread:$0]  %s374, 128, %s371, %s360
        $region44: #{tpu_custom_call.1} parent=39 // pred_fallthru
          _
      $region40: #{tpu_custom_call.1} parent=5 // pred_fallthru
        _
      %p377 = scmp.le.s32.totalorder 2, %s14
      // Predicated region
      $region45: #{tpu_custom_call.1} parent=5 // pred_check
        %p378 = pneg %p377
      $region46: #{tpu_custom_call.1} parent=5 // pred_check_branch
        %380 = sbr.rel (%p378) target = $region48
      $region47: #{tpu_custom_call.1} parent=5 // pred_region
        %s381 = ssub.s32 %s14, 2
        // Predicated region
        $region49: #{tpu_custom_call.1} parent=47 // pred_check
          %p382 = pneg %p153
        $region50: #{tpu_custom_call.1} parent=47 // pred_check_branch
          %384 = sbr.rel (%p382) target = $region52
        $region51: #{tpu_custom_call.1} parent=47 // pred_region
          %s385 = sand.u32 %s138, 1
          %s386 = scalar_lea.sflag [#allocation3], %s385
          %s387 = sand.u32 %s138, 1
          %s388 = smul.addr %s387, 8
          %s389 = scalar_lea.vmem [#allocation2], %s388
          %390 = dma.done %s386, 128
        $region52: #{tpu_custom_call.1} parent=47 // pred_fallthru
          _
      $region48: #{tpu_custom_call.1} parent=5 // pred_fallthru
        _
    $region6: #{tpu_custom_call.1} parent=1 // loop_footer
      %s18 = sadd.s32 1, %s14
    $region7: #{tpu_custom_call.1} parent=1 // loop_footer_branch
      %13 = sbr.rel target = $region3
    $region8: #{tpu_custom_call.1} parent=1 // loop_exit
      _
    %391 = vsyncpa [#allocation3], 1
    %s392 = scalar_lea.sflag [#allocation3], 1
    %393 = vsyncpa %s392, 1

</llo_original>
